<compile_context>
chip_gen: v7x
topology: tpu7x:2x2x1
jax: 0.10.0
libtpu: 0.0.40
codegen_flags: <defaults>
</compile_context>

<pallas_src>
import functools

import jax
import jax.numpy as jnp
from jax.experimental import pallas as pl
from jax.experimental.pallas import tpu as pltpu

LANES = 128           # lane width (last dim of every block)
MAX_TILE_ROWS = 4096  # rows of 128 lanes per grid step (2 MiB f32 per input)


def _nonzero_loss_batched_kernel(x_ref, y_ref, out_ref, *, inv_m):
    """Small-per-sample path.  Grid = (batch_tiles,).

    Each step loads (bt, rows, 128) of x and y, computes bt per-batch sums,
    and writes exp(-min(mean_x, mean_y)) for bt batch elements as a single
    lane-oriented (1, 1, bt) block."""
    xf = x_ref[...].astype(jnp.float32)              # (bt, rows, LANES)
    yf = y_ref[...].astype(jnp.float32)
    sx = xf.sum(axis=1).sum(axis=1)                  # (bt,)
    sy = yf.sum(axis=1).sum(axis=1)                  # (bt,)
    res = jnp.exp(-jnp.minimum(sx * inv_m, sy * inv_m))   # (bt,)
    out_ref[...] = res.reshape(out_ref.shape)


def _nonzero_loss_stream_kernel(x_ref, y_ref, out_ref, acc_x_ref, acc_y_ref,
                                *, rows, tile_rows, inv_m):
    """Large-per-sample path.  Grid = (batch, row_tiles).

    Per step, the (tile_rows, 128) slab is reduced down to one (8, 128) vreg
    with VALU adds and accumulated; on the last row tile a single
    cross-sublane + cross-lane reduce produces the per-batch scalar."""
    k = pl.program_id(1)
    k_last = pl.num_programs(1) - 1

    @pl.when(k == 0)
    def _init():
        acc_x_ref[...] = jnp.zeros_like(acc_x_ref)
        acc_y_ref[...] = jnp.zeros_like(acc_y_ref)

    n_slabs = tile_rows // 8  # static (tile_rows is a multiple of 8)

    def slab_sum(t):  # (tile_rows, LANES) f32 -> (8, LANES); VALU adds only
        return t.reshape(n_slabs, 8, LANES).sum(axis=0)

    rem_rows = rows % tile_rows  # static Python int (decided at trace time)
    if rem_rows == 0:
        # Every tile is full: pure elementwise adds, no masking anywhere.
        acc_x_ref[...] += slab_sum(x_ref[0].astype(jnp.float32))
        acc_y_ref[...] += slab_sum(y_ref[0].astype(jnp.float32))
    else:
        # Only the last tile is ragged; keep the hot path unmasked.
        @pl.when(k != k_last)
        def _full_tile():
            acc_x_ref[...] += slab_sum(x_ref[0].astype(jnp.float32))
            acc_y_ref[...] += slab_sum(y_ref[0].astype(jnp.float32))

        @pl.when(k == k_last)
        def _ragged_tile():
            # The last tile reads past the row extent: SELECT (never
            # multiply-by-mask) the valid rows so block-padding garbage
            # (possibly NaN/Inf) is dropped.
            row = jax.lax.broadcasted_iota(jnp.int32, (tile_rows, LANES), 0)
            valid = row < rem_rows
            acc_x_ref[...] += slab_sum(
                jnp.where(valid, x_ref[0].astype(jnp.float32), 0.0))
            acc_y_ref[...] += slab_sum(
                jnp.where(valid, y_ref[0].astype(jnp.float32), 0.0))

    @pl.when(k == k_last)
    def _finalize():
        # One cross-sublane + cross-lane reduce per batch element, on 1 vreg.
        sx = jnp.sum(jnp.sum(acc_x_ref[...], axis=0, keepdims=True),
                     axis=1, keepdims=True)          # (1, 1)
        sy = jnp.sum(jnp.sum(acc_y_ref[...], axis=0, keepdims=True),
                     axis=1, keepdims=True)          # (1, 1)
        out_ref[0] = jnp.exp(-jnp.minimum(sx * inv_m, sy * inv_m))


def non_zero_loss(x, y, weight=None, *, max_tile_rows=MAX_TILE_ROWS):
    """JAX/Pallas equivalent of NonZeroLoss.forward(x, y, weight).

    `weight` is accepted for signature parity with the PyTorch module but is
    unused (the reference forward ignores it)."""
    assert x.shape == y.shape, (x.shape, y.shape)
    n = x.shape[0]
    m = 1
    for d in x.shape[1:]:
        m *= d
    assert n > 0 and m > 0

    xf = jnp.reshape(x, (n, m))
    yf = jnp.reshape(y, (n, m))

    # Lane-pad the reduced dim to a multiple of 128.  Zero padding does not
    # change the sums (we divide by the true count m); this copy only happens
    # when m % 128 != 0.
    # TODO(synk): for unaligned m this pad is an extra full HBM read+write of
    # both inputs; a manual-DMA (memory_space=pl.ANY) path with a lane mask on
    # the final partial chunk would avoid it.
    m_pad = pl.cdiv(m, LANES) * LANES
    if m_pad != m:
        xf = jnp.pad(xf, ((0, 0), (0, m_pad - m)))
        yf = jnp.pad(yf, ((0, 0), (0, m_pad - m)))

    rows = m_pad // LANES
    x3 = jnp.reshape(xf, (n, rows, LANES))
    y3 = jnp.reshape(yf, (n, rows, LANES))
    inv_m = 1.0 / m

    in_bytes = x3.dtype.itemsize + y3.dtype.itemsize
    cost = pl.CostEstimate(
        flops=int(2 * n * m_pad),            # accumulate adds for x and y
        transcendentals=int(n),              # one exp per batch element
        bytes_accessed=int(n * m_pad * in_bytes + 4 * n),
    )
    vmem_limit = 32 * 1024 * 1024            # safe headroom on v5e/v6e/v7x

    if rows <= max_tile_rows:
        # Small per-sample size: fold batch into the block so each grid step
        # streams up to ~2 MiB per input and writes a lane-oriented output.
        bt = max(1, min(n, max_tile_rows // rows))
        batch_tiles = pl.cdiv(n, bt)
        kernel = functools.partial(_nonzero_loss_batched_kernel, inv_m=inv_m)
        per_batch = pl.pallas_call(
            kernel,
            out_shape=jax.ShapeDtypeStruct((batch_tiles, 1, bt), jnp.float32),
            grid_spec=pltpu.PrefetchScalarGridSpec(
                num_scalar_prefetch=0,
                grid=(batch_tiles,),
                in_specs=[
                    pl.BlockSpec((bt, rows, LANES), lambda b: (b, 0, 0)),
                    pl.BlockSpec((bt, rows, LANES), lambda b: (b, 0, 0)),
                ],
                out_specs=pl.BlockSpec((1, 1, bt), lambda b: (b, 0, 0)),
            ),
            compiler_params=pltpu.CompilerParams(
                dimension_semantics=("parallel",),
                vmem_limit_bytes=vmem_limit,
            ),
            cost_estimate=cost,
        )(x3, y3)
        # A ragged final batch tile may hold garbage entries; slice them away
        # before the mean.
        per_batch = jnp.reshape(per_batch, (-1,))[:n]
    else:
        # Large per-sample size: stream row tiles, accumulate 1 vreg / input.
        tile_rows = max(8, (max_tile_rows // 8) * 8)
        row_tiles = pl.cdiv(rows, tile_rows)
        kernel = functools.partial(_nonzero_loss_stream_kernel,
                                   rows=rows, tile_rows=tile_rows, inv_m=inv_m)
        per_batch = pl.pallas_call(
            kernel,
            out_shape=jax.ShapeDtypeStruct((n, 1, 1), jnp.float32),
            grid_spec=pltpu.PrefetchScalarGridSpec(
                num_scalar_prefetch=0,
                grid=(n, row_tiles),
                in_specs=[
                    pl.BlockSpec((1, tile_rows, LANES), lambda b, k: (b, k, 0)),
                    pl.BlockSpec((1, tile_rows, LANES), lambda b, k: (b, k, 0)),
                ],
                out_specs=pl.BlockSpec((1, 1, 1), lambda b, k: (b, 0, 0)),
                scratch_shapes=[
                    pltpu.VMEM((8, LANES), jnp.float32),   # one vreg each
                    pltpu.VMEM((8, LANES), jnp.float32),
                ],
            ),
            compiler_params=pltpu.CompilerParams(
                dimension_semantics=("parallel", "arbitrary"),
                vmem_limit_bytes=vmem_limit,
            ),
            cost_estimate=cost,
        )(x3, y3)
        per_batch = jnp.reshape(per_batch, (-1,))

    # Tiny cross-batch mean over n scalars; kept in JAX so the batch grid axis
    # can stay "parallel" (uses both TensorCores on v7x).
    return jnp.mean(per_batch)


if __name__ == "__main__":
    def ref_loss(x, y):
        a = jnp.mean(x, axis=(1, 2, 3))
        b = jnp.mean(y, axis=(1, 2, 3))
        return jnp.mean(jnp.exp(-jnp.minimum(a, b)))

    key = jax.random.PRNGKey(0)
    kx, ky, kw, kx2, ky2 = jax.random.split(key, 5)

    # NCHW shapes consistent with the module's mean over dims (1, 2, 3).
    x = jax.random.normal(kx, (2, 4, 16, 16), dtype=jnp.float32)
    y = jax.random.normal(ky, (2, 4, 16, 16), dtype=jnp.float32)
    weight = jax.random.normal(kw, (2, 4, 16, 16), dtype=jnp.float32)  # unused by forward

    # Path 1: small-per-sample batched kernel (the shapes above).
    out1 = jax.block_until_ready(non_zero_loss(x, y, weight))
    ref1 = ref_loss(x, y)
    assert jnp.allclose(out1, ref1, rtol=1e-5, atol=1e-6), (out1, ref1)

    # Path 2: streaming kernel with lane padding + ragged last row tile,
    # forced via a tiny max_tile_rows so both code paths run on TPU.
    x2 = jax.random.normal(kx2, (2, 3, 20, 20), dtype=jnp.float32)
    y2 = jax.random.normal(ky2, (2, 3, 20, 20), dtype=jnp.float32)
    out2 = jax.block_until_ready(non_zero_loss(x2, y2, None, max_tile_rows=8))
    ref2 = ref_loss(x2, y2)
    assert jnp.allclose(out2, ref2, rtol=1e-5, atol=1e-6), (out2, ref2)

    print("KERNEL_OK")
</pallas_src>

<mosaic_0001>
module attributes {stable_mosaic.version = 11 : i64} {
  func.func @_nonzero_loss_batched_kernel(%arg0: i32, %arg1: memref<2x8x128xf32, #tpu.memory_space<vmem>>, %arg2: memref<2x8x128xf32, #tpu.memory_space<vmem>>, %arg3: memref<1x1x2xf32, #tpu.memory_space<vmem>>) attributes {dimension_semantics = [#tpu.dimension_semantics<parallel>], iteration_bounds = array<i64: 1>, scalar_prefetch = 0 : i64, scratch_operands = 0 : i64, tpu.core_type = #tpu.core_type<tc>, window_params = [{transform_indices = @transform_0, window_bounds = array<i64: 2, 8, 128>}, {transform_indices = @transform_1, window_bounds = array<i64: 2, 8, 128>}, {transform_indices = @transform_2, window_bounds = array<i64: 1, 1, 2>}]} {
    %c0 = arith.constant 0 : index
    %c0_0 = arith.constant 0 : index
    %c0_1 = arith.constant 0 : index
    %0 = vector.load %arg1[%c0, %c0_0, %c0_1] : memref<2x8x128xf32, #tpu.memory_space<vmem>>, vector<2x8x128xf32>
    %c0_2 = arith.constant 0 : index
    %c0_3 = arith.constant 0 : index
    %c0_4 = arith.constant 0 : index
    %1 = vector.load %arg2[%c0_2, %c0_3, %c0_4] : memref<2x8x128xf32, #tpu.memory_space<vmem>>, vector<2x8x128xf32>
    %cst = arith.constant dense<0.000000e+00> : vector<2x128xf32>
    %2 = vector.multi_reduction <add>, %0, %cst [1] : vector<2x8x128xf32> to vector<2x128xf32>
    %cst_5 = arith.constant dense<0.000000e+00> : vector<2xf32>
    %3 = vector.multi_reduction <add>, %2, %cst_5 [1] : vector<2x128xf32> to vector<2xf32>
    %cst_6 = arith.constant dense<0.000000e+00> : vector<2x128xf32>
    %4 = vector.multi_reduction <add>, %1, %cst_6 [1] : vector<2x8x128xf32> to vector<2x128xf32>
    %cst_7 = arith.constant dense<0.000000e+00> : vector<2xf32>
    %5 = vector.multi_reduction <add>, %4, %cst_7 [1] : vector<2x128xf32> to vector<2xf32>
    %cst_8 = arith.constant 9.765625E-4 : f32
    %6 = vector.broadcast %cst_8 : f32 to vector<2xf32>
    %7 = arith.mulf %3, %6 : vector<2xf32>
    %cst_9 = arith.constant 9.765625E-4 : f32
    %8 = vector.broadcast %cst_9 : f32 to vector<2xf32>
    %9 = arith.mulf %5, %8 : vector<2xf32>
    %10 = arith.minimumf %7, %9 : vector<2xf32>
    %cst_10 = arith.constant 0.000000e+00 : f32
    %11 = vector.broadcast %cst_10 : f32 to vector<2xf32>
    %12 = arith.subf %11, %10 : vector<2xf32>
    %13 = math.exp %12 : vector<2xf32>
    %14 = vector.shape_cast %13 : vector<2xf32> to vector<1x1x2xf32>
    %c0_11 = arith.constant 0 : index
    %c0_12 = arith.constant 0 : index
    %c0_13 = arith.constant 0 : index
    %15 = vector.load %arg3[%c0_11, %c0_12, %c0_13] : memref<1x1x2xf32, #tpu.memory_space<vmem>>, vector<1x1x2xf32>
    tpu.vector_store %arg3[%c0_11, %c0_12, %c0_13], %14 {strides = array<i32>} : memref<1x1x2xf32, #tpu.memory_space<vmem>>, vector<1x1x2xf32>,
    return
  }
  func.func @transform_0(%arg0: i32) -> (i32, i32, i32) {
    %c0_i32 = arith.constant 0 : i32
    %c0_i32_0 = arith.constant 0 : i32
    %c0_i32_1 = arith.constant 0 : i32
    return %arg0, %c0_i32, %c0_i32_0 : i32, i32, i32
  }
  func.func @transform_1(%arg0: i32) -> (i32, i32, i32) {
    %c0_i32 = arith.constant 0 : i32
    %c0_i32_0 = arith.constant 0 : i32
    %c0_i32_1 = arith.constant 0 : i32
    return %arg0, %c0_i32, %c0_i32_0 : i32, i32, i32
  }
  func.func @transform_2(%arg0: i32) -> (i32, i32, i32) {
    %c0_i32 = arith.constant 0 : i32
    %c0_i32_0 = arith.constant 0 : i32
    %c0_i32_1 = arith.constant 0 : i32
    return %arg0, %c0_i32, %c0_i32_0 : i32, i32, i32
  }
}

</mosaic_0001>

<llo_original>
// kernel: tpu_custom_call.1
$region0: #{tpu_custom_call.1}
  #allocation0 [shape = 'u32[]', space=smem, size = 0x4, offset = 0x4, fixed_abs, tag = 'smem constant byte address 0x4 - core index']
  #allocation1 [shape = 'u32[144,128]{1,0:T(1,128)}', space=vmem, size = 0x12000, scoped, tag = 'internal scratch']
  %s0 = inlined_call_operand.hbm [shape: f32[2,8,128], index: 0, kind: input, shape index: {}]
  %s1 = inlined_call_operand.hbm [shape: f32[2,8,128], index: 1, kind: input, shape index: {}]
  %s2 = inlined_call_operand.hbm [shape: f32[1,1,2], index: 2, kind: output, shape index: {}]
  %s3 = sld [smem:[#allocation0]]
  $region26: #{tpu_custom_call.1} parent=0
    _
  %s5 = ssub.s32 1, %s3
  %s6 = scalar_select 0, %s5, %s3
  $region1: #{tpu_custom_call.1} parent=0
    #allocation2 [shape = 'u8[8192]{0}', space=vmem, size = 0x2000, scoped, tag = 'input window, operand 0, single buffered']
    #allocation3 [shape = 's32[1]{0}', space=sflag, size = 0x4, scoped, tag = 'scoped memory for tpu_custom_call.1']
    #allocation4 [shape = 's32[1]{0}', space=sflag, size = 0x4, scoped, tag = 'scoped memory for tpu_custom_call.1']
    #allocation5 [shape = 'u8[8192]{0}', space=vmem, size = 0x2000, scoped, tag = 'input window, operand 1, single buffered']
    #allocation6 [shape = 's32[1]{0}', space=sflag, size = 0x4, scoped, tag = 'scoped memory for tpu_custom_call.1']
    #allocation7 [shape = 'u8[512]{0}', space=vmem, size = 0x400, scoped, tag = 'output window, operand 0, single buffered']
    %7 = vsyncpa [#allocation3], 0
    %8 = vsyncpa [#allocation6], 0
    %9 = vsyncpa [#allocation4], 0
    // Predicated region
    $region2: #{tpu_custom_call.1} parent=1 // pred_check
      _
    $region3: #{tpu_custom_call.1} parent=1 // pred_check_branch
      %11 = sbr.rel (0) target = $region5
    $region4: #{tpu_custom_call.1} parent=1 // pred_region
      %s13 = ssub.s32 256, 256
      %14 = vsyncadd [#allocation3], %s13
      %s15 = sshll.u32 [#allocation2], 4
      %s16 = int_to_ptr.vmem [resolvable:$true] %s15
      %21 = dma.hbm_to_vmem [thread:$0]  %s0, 256, %s16, [#allocation3], 128, 128, 8
    $region5: #{tpu_custom_call.1} parent=1 // pred_fallthru
      _
    // Predicated region
    $region6: #{tpu_custom_call.1} parent=1 // pred_check
      _
    $region7: #{tpu_custom_call.1} parent=1 // pred_check_branch
      %23 = sbr.rel (0) target = $region9
    $region8: #{tpu_custom_call.1} parent=1 // pred_region
      %s25 = ssub.s32 256, 256
      %26 = vsyncadd [#allocation6], %s25
      %s27 = sshll.u32 [#allocation5], 4
      %s28 = int_to_ptr.vmem [resolvable:$true] %s27
      %33 = dma.hbm_to_vmem [thread:$0]  %s1, 256, %s28, [#allocation6], 128, 128, 8
    $region9: #{tpu_custom_call.1} parent=1 // pred_fallthru
      _
    // Predicated region
    $region10: #{tpu_custom_call.1} parent=1 // pred_check
      _
    $region11: #{tpu_custom_call.1} parent=1 // pred_check_branch
      %35 = sbr.rel (0) target = $region13
    $region12: #{tpu_custom_call.1} parent=1 // pred_region
      %36 = dma.done [#allocation3], 256
    $region13: #{tpu_custom_call.1} parent=1 // pred_fallthru
      _
    // Predicated region
    $region14: #{tpu_custom_call.1} parent=1 // pred_check
      _
    $region15: #{tpu_custom_call.1} parent=1 // pred_check_branch
      %38 = sbr.rel (0) target = $region17
    $region16: #{tpu_custom_call.1} parent=1 // pred_region
      %39 = dma.done [#allocation6], 256
    $region17: #{tpu_custom_call.1} parent=1 // pred_fallthru
      _
    %v40 = vld [vmem:[#allocation2] sm:$0xff]
    %v41 = vld [vmem:[#allocation2 + $0x8] sm:$0xff]
    %v42 = vld [vmem:[#allocation5] sm:$0xff]
    %v43 = vld [vmem:[#allocation5 + $0x8] sm:$0xff]
    %v44 = vrot.slane %v40, 4
    %v45 = vadd.f32 %v40, %v44
    %v46 = vrot.slane %v45, 2
    %v47 = vadd.f32 %v45, %v46
    %v48 = vrot.slane %v47, 1
    %v49 = vadd.f32 %v47, %v48
    %v50 = vrot.slane %v41, 4
    %v51 = vadd.f32 %v41, %v50
    %v52 = vrot.slane %v51, 2
    %v53 = vadd.f32 %v51, %v52
    %v54 = vrot.slane %v53, 1
    %v55 = vadd.f32 %v53, %v54
    %vm58 = vcmask 1041409
    %v59 = vsel %vm58, %v55, %v49
    %vm61 = vcmask 1041408
    %v62 = vsel %vm61, %v59, 0.0
    %63 = vadd.xlane.f32.xlu0 %v62
    %v64 = vpop.xlane.xlu0 %63
    %v65 = vrot.slane %v42, 4
    %v66 = vadd.f32 %v42, %v65
    %v67 = vrot.slane %v66, 2
    %v68 = vadd.f32 %v66, %v67
    %v69 = vrot.slane %v68, 1
    %v70 = vadd.f32 %v68, %v69
    %v71 = vrot.slane %v43, 4
    %v72 = vadd.f32 %v43, %v71
    %v73 = vrot.slane %v72, 2
    %v74 = vadd.f32 %v72, %v73
    %v75 = vrot.slane %v74, 1
    %v76 = vadd.f32 %v74, %v75
    %v79 = vsel %vm58, %v76, %v70
    %v81 = vsel %vm61, %v79, 0.0
    %82 = vadd.xlane.f32.xlu0 %v81
    %v83 = vpop.xlane.xlu0 %82
    %v84 = vmul.f32 %v64, 0.0009765625
    %v85 = vmul.f32 %v83, 0.0009765625
    %v86 = vmin.f32 %v84, %v85
    %v87 = vsub.f32 0.0, %v86
    %v88 = vmul.f32 %v87, 1.442695
    %v89 = vpow.pop %v88
    %v91 = vlaneseq
    %v92 = vand.u32 %v91, 127
    %v93 = vlaneseq
    %v94 = vshrl.u32 %v93, 7
    %v95 = vsub.s32 %v92, %v94
    %v96 = vrot.slane %v89, %v95
    %vm98 = vcmask 8192
    %99 = vst.msk [vmem:[#allocation7] sm:$0x1] %vm98, %v96
    // Predicated region
    $region18: #{tpu_custom_call.1} parent=1 // pred_check
      _
    $region19: #{tpu_custom_call.1} parent=1 // pred_check_branch
      %101 = sbr.rel (0) target = $region21
    $region20: #{tpu_custom_call.1} parent=1 // pred_region
      %s103 = ssub.s32 16, 16
      %104 = vsyncadd [#allocation4], %s103
      %s106 = sshll.u32 [#allocation7], 4
      %s107 = int_to_ptr.vmem [resolvable:$true] %s106
      %109 = dma.vmem_to_hbm [thread:$0]  %s107, 16, %s2, [#allocation4]
    $region21: #{tpu_custom_call.1} parent=1 // pred_fallthru
      _
    // Predicated region
    $region22: #{tpu_custom_call.1} parent=1 // pred_check
      _
    $region23: #{tpu_custom_call.1} parent=1 // pred_check_branch
      %111 = sbr.rel (0) target = $region25
    $region24: #{tpu_custom_call.1} parent=1 // pred_region
      %112 = dma.done [#allocation4], 16
    $region25: #{tpu_custom_call.1} parent=1 // pred_fallthru
      _
    %113 = vsyncpa [#allocation3], 1
    %114 = vsyncpa [#allocation6], 1
    %115 = vsyncpa [#allocation4], 1

</llo_original>
